<compile_context>
chip_gen: v5e
topology: v5e:2x2
jax: 0.10.0
libtpu: 0.0.40
codegen_flags: <defaults>
</compile_context>

<pallas_src>
import functools

import jax
import jax.numpy as jnp
from jax.experimental import pallas as pl
from jax.experimental.pallas import tpu as pltpu

VMEM_LIMIT = 32 * 1024 * 1024  # explicit scoped-VMEM budget, safe on v5e/v6e/v7x


# ----------------------------------------------------------------------------
# Kernel 1: fused 3x3 conv (folded BN) + SiLU, 9-tap MXU accumulation in VMEM.
# ----------------------------------------------------------------------------
def _conv3x3_silu_kernel(r0_ref, r1_ref, r2_ref, w_ref, b_ref, o_ref, *, width, cin):
    nout = o_ref.shape[-1]
    acc = jnp.zeros((width, nout), jnp.float32)
    for ti, rref in enumerate((r0_ref, r1_ref, r2_ref)):
        row = rref[...]                                    # (W+2, Cin) bf16, in VMEM
        for tj in range(3):
            tap = ti * 3 + tj
            acc += jnp.dot(row[tj:tj + width, :],
                           w_ref[tap * cin:(tap + 1) * cin, :],
                           preferred_element_type=jnp.float32)
    y = acc + b_ref[...]                                   # folded-BN bias (f32)
    y = y * jax.nn.sigmoid(y)                              # SiLU in f32
    o_ref[...] = y.astype(o_ref.dtype)


def conv3x3_silu(x, w9, bias):
    """x: (B,H,W,Cin) bf16; w9: (9*Cin, N) bf16, tap-major rows, BN scale folded;
    bias: (1, N) f32.  Returns SiLU(conv3x3(x) + bias) as (B,H,W,N) bf16."""
    B, H, W, C = x.shape
    N = w9.shape[1]
    xp = jnp.pad(x, ((0, 0), (1, 1), (1, 1), (0, 0)))      # (B, H+2, W+2, C)

    def row_spec(ti):
        return pl.BlockSpec((None, None, W + 2, C),
                            lambda b, h, _t=ti: (b, h + _t, 0, 0))

    return pl.pallas_call(
        functools.partial(_conv3x3_silu_kernel, width=W, cin=C),
        out_shape=jax.ShapeDtypeStruct((B, H, W, N), jnp.bfloat16),
        grid_spec=pltpu.PrefetchScalarGridSpec(
            num_scalar_prefetch=0,
            grid=(B, H),
            in_specs=[row_spec(0), row_spec(1), row_spec(2),
                      pl.BlockSpec((9 * C, N), lambda b, h: (0, 0)),
                      pl.BlockSpec((1, N), lambda b, h: (0, 0))],
            out_specs=pl.BlockSpec((None, None, W, N), lambda b, h: (b, h, 0, 0)),
        ),
        compiler_params=pltpu.CompilerParams(
            dimension_semantics=("parallel", "parallel"),
            vmem_limit_bytes=VMEM_LIMIT),
    )(xp, xp, xp, w9, bias)


# ----------------------------------------------------------------------------
# Kernel 2: fused 1x1 head matmul + bias, emitting the transposed (no, HW) layout.
# ----------------------------------------------------------------------------
def _head_kernel(x_ref, wt_ref, b_ref, o_ref):
    # (no, C) @ (C, tm) -> (no, tm); the rhs transpose folds into the MXU op.
    y = jnp.dot(wt_ref[...], x_ref[...].T, preferred_element_type=jnp.float32)
    o_ref[...] = (y + b_ref[...]).astype(o_ref.dtype)


def head_1x1(x_flat, w_t, bias):
    """x_flat: (B, HW, C) bf16; w_t: (no, C) bf16; bias: (no, 1) f32.
    Returns (B, no, HW) f32, i.e. already in the (channels, anchors) layout."""
    B, HW, C = x_flat.shape
    no = w_t.shape[0]
    tm = HW
    for cand in (512, 256, 128):
        if HW % cand == 0:
            tm = cand
            break
    return pl.pallas_call(
        _head_kernel,
        out_shape=jax.ShapeDtypeStruct((B, no, HW), jnp.float32),
        grid_spec=pltpu.PrefetchScalarGridSpec(
            num_scalar_prefetch=0,
            grid=(B, HW // tm),
            in_specs=[pl.BlockSpec((None, tm, C), lambda b, m: (b, m, 0)),
                      pl.BlockSpec((no, C), lambda b, m: (0, 0)),
                      pl.BlockSpec((no, 1), lambda b, m: (0, 0))],
            out_specs=pl.BlockSpec((None, no, tm), lambda b, m: (b, 0, m)),
        ),
        compiler_params=pltpu.CompilerParams(
            dimension_semantics=("parallel", "parallel"),
            vmem_limit_bytes=VMEM_LIMIT),
    )(x_flat, w_t, bias)


# ----------------------------------------------------------------------------
# Kernel 3: DFL softmax-expectation + dist2bbox + cls sigmoid, tiled over anchors.
# ----------------------------------------------------------------------------
def _detect_post_kernel(f_ref, anc_ref, str_ref, o_ref, *, reg_max, nc):
    f = f_ref[...]                                         # (B, no, TA) f32
    B = f.shape[0]
    ta = f.shape[-1]
    box = f[:, :4 * reg_max, :]                            # (B, 4*reg_max, TA)
    cls = f[:, 4 * reg_max:4 * reg_max + nc, :]            # (B, nc, TA)

    # DFL: per-side max for stability, then ONE exp over all 4 sides at once.
    maxes = [jnp.max(box[:, j * reg_max:(j + 1) * reg_max, :], axis=1, keepdims=True)
             for j in range(4)]
    mfull = jnp.concatenate(
        [jnp.broadcast_to(m, (B, reg_max, ta)) for m in maxes], axis=1)
    e = jnp.exp(box - mfull)                               # single EUP stream
    bins = jax.lax.broadcasted_iota(jnp.float32, (1, reg_max, 1), 1)

    dist = []
    for j in range(4):
        ej = e[:, j * reg_max:(j + 1) * reg_max, :]        # (B, reg_max, TA)
        den = jnp.sum(ej, axis=1)                          # (B, TA)
        num = jnp.sum(ej * bins, axis=1)
        # Exact division: the approx EUP reciprocal (~2^-8 rel. error) was the
        # dominant mismatch vs. the reference once scaled by bins*stride.
        dist.append(num / den)
    l, t, r, b = dist

    ax = anc_ref[0:1, :]                                   # (1, TA)
    ay = anc_ref[1:2, :]
    s = str_ref[...]                                       # (1, TA)
    x1 = ax - l
    y1 = ay - t
    x2 = ax + r
    y2 = ay + b
    # dist2bbox (xywh) * stride, assembled and stored as one dense block.
    dbox = jnp.concatenate([
        ((x1 + x2) * 0.5 * s)[:, None, :],
        ((y1 + y2) * 0.5 * s)[:, None, :],
        ((x2 - x1) * s)[:, None, :],
        ((y2 - y1) * s)[:, None, :],
    ], axis=1)                                             # (B, 4, TA)
    o_ref[...] = jnp.concatenate([dbox, jax.nn.sigmoid(cls)], axis=1)


def detect_post(cat, anchors, stride_t, *, reg_max, nc):
    """cat: (B, 4*reg_max+nc, A) f32; anchors: (2, A); stride_t: (1, A)."""
    B, no, A = cat.shape
    A_pad = ((A + 127) // 128) * 128                       # lane-dense anchor axis
    ta = 128
    for cand in (1024, 512, 256):
        if A_pad % cand == 0:
            ta = cand
            break
    pad = A_pad - A
    catp = jnp.pad(cat, ((0, 0), (0, 0), (0, pad)))
    ancp = jnp.pad(anchors, ((0, 0), (0, pad)))
    strp = jnp.pad(stride_t, ((0, 0), (0, pad)))
    out = pl.pallas_call(
        functools.partial(_detect_post_kernel, reg_max=reg_max, nc=nc),
        out_shape=jax.ShapeDtypeStruct((B, 4 + nc, A_pad), jnp.float32),
        grid_spec=pltpu.PrefetchScalarGridSpec(
            num_scalar_prefetch=0,
            grid=(A_pad // ta,),
            in_specs=[pl.BlockSpec((B, no, ta), lambda a: (0, 0, a)),
                      pl.BlockSpec((2, ta), lambda a: (0, a)),
                      pl.BlockSpec((1, ta), lambda a: (0, a))],
            out_specs=pl.BlockSpec((B, 4 + nc, ta), lambda a: (0, 0, a)),
        ),
        compiler_params=pltpu.CompilerParams(
            dimension_semantics=("parallel",),
            vmem_limit_bytes=VMEM_LIMIT),
    )(catp, ancp, strp)
    return out[:, :, :A]


# ----------------------------------------------------------------------------
# Pure-JAX references of the same folded / bf16 math (per-kernel sanity checks).
# ----------------------------------------------------------------------------
def conv3x3_silu_ref(x, w9, bias):
    B, H, W, C = x.shape
    N = w9.shape[1]
    xp = jnp.pad(x, ((0, 0), (1, 1), (1, 1), (0, 0)))
    acc = jnp.zeros((B, H, W, N), jnp.float32)
    for tap in range(9):
        ti, tj = divmod(tap, 3)
        acc = acc + jnp.einsum("bhwc,cn->bhwn",
                               xp[:, ti:ti + H, tj:tj + W, :],
                               w9[tap * C:(tap + 1) * C, :],
                               preferred_element_type=jnp.float32)
    y = acc + bias
    return (y * jax.nn.sigmoid(y)).astype(jnp.bfloat16)


def head_1x1_ref(x_flat, w_t, bias):
    y = jnp.einsum("bmc,nc->bnm", x_flat, w_t, preferred_element_type=jnp.float32)
    return y + bias[None]


def detect_post_ref(cat, anchors, stride_t, *, reg_max, nc):
    B, no, A = cat.shape
    box, cls = cat[:, :4 * reg_max, :], cat[:, 4 * reg_max:, :]
    b4 = box.reshape(B, 4, reg_max, A)
    p = jax.nn.softmax(b4, axis=2)
    bins = jnp.arange(reg_max, dtype=jnp.float32).reshape(1, 1, reg_max, 1)
    dist = jnp.sum(p * bins, axis=2)                       # (B, 4, A)
    lt, rb = dist[:, :2, :], dist[:, 2:, :]
    anc = anchors[None]                                    # (1, 2, A)
    x1y1 = anc - lt
    x2y2 = anc + rb
    c_xy = (x1y1 + x2y2) / 2.0
    wh = x2y2 - x1y1
    dbox = jnp.concatenate([c_xy, wh], axis=1) * stride_t
    return jnp.concatenate([dbox, jax.nn.sigmoid(cls)], axis=1)


# ----------------------------------------------------------------------------
# Parameters: PyTorch-equivalent init, then BN folding + branch fusion.
# ----------------------------------------------------------------------------
def init_params(key, nc, ch, reg_max=16):
    c2 = max(16, ch[0] // 4, reg_max * 4)
    c3 = max(ch[0], nc)
    eps = 1e-5

    def conv_bn(k, cin, cout, ksz=3):
        k1, k2, k3, k4, k5 = jax.random.split(k, 5)
        w = jax.random.normal(k1, (cout, cin, ksz, ksz), jnp.float32) / jnp.sqrt(cin * ksz * ksz)
        gamma = 1.0 + 0.1 * jax.random.normal(k2, (cout,), jnp.float32)
        beta = 0.1 * jax.random.normal(k3, (cout,), jnp.float32)
        mean = 0.1 * jax.random.normal(k4, (cout,), jnp.float32)
        var = 1.0 + 0.5 * jax.random.uniform(k5, (cout,), jnp.float32)
        scale = gamma / jnp.sqrt(var + eps)                # eval-mode BN folded
        bias = beta - mean * scale
        return {"w": w, "scale": scale, "bias": bias}

    def head(k, cin, cout):
        k1, k2 = jax.random.split(k)
        w = jax.random.normal(k1, (cout, cin, 1, 1), jnp.float32) / jnp.sqrt(cin)
        b = 0.1 * jax.random.normal(k2, (cout,), jnp.float32)
        return {"w": w, "b": b}

    params = {"cv2": [], "cv3": []}
    keys = iter(jax.random.split(key, 6 * len(ch)))
    for cin in ch:
        params["cv2"].append({"l0": conv_bn(next(keys), cin, c2),
                              "l1": conv_bn(next(keys), c2, c2),
                              "head": head(next(keys), c2, 4 * reg_max)})
        params["cv3"].append({"l0": conv_bn(next(keys), cin, c3),
                              "l1": conv_bn(next(keys), c3, c3),
                              "head": head(next(keys), c3, nc)})
    return params


def fuse_level_params(cv2p, cv3p, nc, reg_max):
    """Fold eval-mode BN into the weights and fuse the cv2/cv3 branches of a level."""
    c2 = cv2p["l0"]["w"].shape[0]
    c3 = cv3p["l0"]["w"].shape[0]

    def conv_mat(p):
        w = p["w"]                                         # (Cout, Cin, 3, 3)
        cout, cin = w.shape[0], w.shape[1]
        wm = jnp.transpose(w, (2, 3, 1, 0)).reshape(9 * cin, cout)   # tap-major rows
        return wm * p["scale"][None, :], p["bias"]         # fold BN scale into columns

    # Layer 0: same input tensor -> concatenate output columns (N = c2 + c3).
    w20, b20 = conv_mat(cv2p["l0"])
    w30, b30 = conv_mat(cv3p["l0"])
    w0 = jnp.concatenate([w20, w30], axis=1)
    b0 = jnp.concatenate([b20, b30])

    # Layer 1: block-diagonal per tap (cv2 path reads channels [:c2], cv3 path [c2:]).
    w21, _b = conv_mat(cv2p["l1"])
    w31, _c = conv_mat(cv3p["l1"])
    b1 = jnp.concatenate([cv2p["l1"]["bias"], cv3p["l1"]["bias"]])
    w21t = w21.reshape(9, c2, c2)
    w31t = w31.reshape(9, c3, c3)
    top = jnp.concatenate([w21t, jnp.zeros((9, c2, c3), jnp.float32)], axis=2)
    bot = jnp.concatenate([jnp.zeros((9, c3, c2), jnp.float32), w31t], axis=2)
    w1 = jnp.concatenate([top, bot], axis=1).reshape(9 * (c2 + c3), c2 + c3)

    # 1x1 heads: block-diagonal, output channels ordered (4*reg_max || nc).
    wh2 = cv2p["head"]["w"][:, :, 0, 0].T                  # (c2, 4*reg_max)
    wh3 = cv3p["head"]["w"][:, :, 0, 0].T                  # (c3, nc)
    wh = jnp.concatenate([
        jnp.concatenate([wh2, jnp.zeros((c2, nc), jnp.float32)], axis=1),
        jnp.concatenate([jnp.zeros((c3, 4 * reg_max), jnp.float32), wh3], axis=1)],
        axis=0)                                            # (c2+c3, no)
    bh = jnp.concatenate([cv2p["head"]["b"], cv3p["head"]["b"]])

    return {"w0": w0.astype(jnp.bfloat16), "b0": b0.reshape(1, -1),
            "w1": w1.astype(jnp.bfloat16), "b1": b1.reshape(1, -1),
            "wht": wh.T.astype(jnp.bfloat16), "bh": bh.reshape(-1, 1)}


# ----------------------------------------------------------------------------
# Glue: anchors + full Detect forward.
# ----------------------------------------------------------------------------
def make_anchors_jax(hw_shapes, strides, offset=0.5):
    anchor_pts, stride_t = [], []
    for (h, w), s in zip(hw_shapes, strides):
        sx = jnp.arange(w, dtype=jnp.float32) + offset
        sy = jnp.arange(h, dtype=jnp.float32) + offset
        syg, sxg = jnp.meshgrid(sy, sx, indexing="ij")
        anchor_pts.append(jnp.stack((sxg, syg), -1).reshape(-1, 2))
        stride_t.append(jnp.full((h * w, 1), s, jnp.float32))
    return jnp.concatenate(anchor_pts, 0), jnp.concatenate(stride_t, 0)


def detect_forward(xs_nchw, fused_params, nc, level_strides, reg_max=16, use_pallas=True):
    conv_fn = conv3x3_silu if use_pallas else conv3x3_silu_ref
    head_fn = head_1x1 if use_pallas else head_1x1_ref
    post_fn = detect_post if use_pallas else detect_post_ref
    no = nc + 4 * reg_max

    feats, hw = [], []
    for x, p in zip(xs_nchw, fused_params):
        xh = jnp.transpose(x, (0, 2, 3, 1)).astype(jnp.bfloat16)    # NCHW -> NHWC, bf16
        h0 = conv_fn(xh, p["w0"], p["b0"])                           # (B,H,W,c2+c3) bf16
        h1 = conv_fn(h0, p["w1"], p["b1"])                           # (B,H,W,c2+c3) bf16
        B, H, W, Cm = h1.shape
        feats.append(head_fn(h1.reshape(B, H * W, Cm), p["wht"], p["bh"]))  # (B,no,HW) f32
        hw.append((H, W))

    cat = jnp.concatenate(feats, axis=2)                             # (B, no, A)
    anc, st = make_anchors_jax(hw, level_strides, 0.5)
    y = post_fn(cat, anc.T, st.T, reg_max=reg_max, nc=nc)
    # torch-style NCHW per-level feature maps: free reshape of (B, no, HW).
    x_list = [f.reshape(f.shape[0], no, h, w) for f, (h, w) in zip(feats, hw)]
    return y, x_list


# ----------------------------------------------------------------------------
if __name__ == "__main__":
    key = jax.random.PRNGKey(0)
    nc = 16
    ch = (8, 16)
    reg_max = 16
    # In ultralytics the parent model fills Detect.stride; set it deterministically.
    level_strides = [8.0, 16.0]

    kp, kx0, kx1 = jax.random.split(key, 3)
    raw = init_params(kp, nc, ch, reg_max)
    fused = [fuse_level_params(raw["cv2"][i], raw["cv3"][i], nc, reg_max)
             for i in range(len(ch))]

    # PyTorch-convention NCHW inputs: two pyramid levels.
    x0 = jax.random.normal(kx0, (2, 8, 8, 8), jnp.float32)    # (B=2, C=8,  H=8, W=8)
    x1 = jax.random.normal(kx1, (2, 16, 4, 4), jnp.float32)   # (B=2, C=16, H=4, W=4)
    xs = [x0, x1]

    # Full module forward on the Pallas path.
    y, feats = detect_forward(xs, fused, nc, level_strides, reg_max, use_pallas=True)
    y = jax.block_until_ready(y)
    feats = [jax.block_until_ready(f) for f in feats]

    A = 8 * 8 + 4 * 4
    no = nc + 4 * reg_max
    assert y.shape == (2, 4 + nc, A), y.shape
    assert feats[0].shape == (2, no, 8, 8), feats[0].shape
    assert feats[1].shape == (2, no, 4, 4), feats[1].shape
    assert bool(jnp.all(jnp.isfinite(y)))

    # ---- Per-kernel checks: kernel and pure-JAX reference get the SAME inputs,
    # ---- so tolerances only cover bf16 rounding / MXU summation-order noise
    # ---- (no chained divergence, no DFL amplification of upstream bf16 noise).
    def check(a, b, atol, rtol, name):
        a32 = jnp.asarray(a, jnp.float32)
        b32 = jnp.asarray(b, jnp.float32)
        ok = bool(jnp.allclose(a32, b32, atol=atol, rtol=rtol))
        assert ok, (name, float(jnp.max(jnp.abs(a32 - b32))))

    feats_chk, hw = [], []
    for x, p in zip(xs, fused):
        xh = jnp.transpose(x, (0, 2, 3, 1)).astype(jnp.bfloat16)
        h0 = conv3x3_silu(xh, p["w0"], p["b0"])
        check(h0, conv3x3_silu_ref(xh, p["w0"], p["b0"]), 1e-1, 1e-1, "conv0")
        h1 = conv3x3_silu(h0, p["w1"], p["b1"])
        check(h1, conv3x3_silu_ref(h0, p["w1"], p["b1"]), 1e-1, 1e-1, "conv1")
        B_, H_, W_, Cm = h1.shape
        xf = h1.reshape(B_, H_ * W_, Cm)
        f = head_1x1(xf, p["wht"], p["bh"])
        check(f, head_1x1_ref(xf, p["wht"], p["bh"]), 5e-2, 5e-2, "head")
        feats_chk.append(f)
        hw.append((H_, W_))

    cat = jnp.concatenate(feats_chk, axis=2)
    anc, st = make_anchors_jax(hw, level_strides, 0.5)
    y_post = detect_post(cat, anc.T, st.T, reg_max=reg_max, nc=nc)
    y_post_ref = detect_post_ref(cat, anc.T, st.T, reg_max=reg_max, nc=nc)
    check(y_post[:, :4, :], y_post_ref[:, :4, :], 3e-1, 1e-1, "dbox")   # DFL+dist2bbox
    check(y_post[:, 4:, :], y_post_ref[:, 4:, :], 5e-2, 5e-2, "cls")    # sigmoid logits

    jax.block_until_ready(y_post)
    print("KERNEL_OK")
</pallas_src>

<mosaic_0001>
module attributes {stable_mosaic.version = 11 : i64} {
  func.func @_conv3x3_silu_kernel(%arg0: i32, %arg1: i32, %arg2: memref<1x1x10x8xbf16, #tpu.memory_space<vmem>>, %arg3: memref<1x1x10x8xbf16, #tpu.memory_space<vmem>>, %arg4: memref<1x1x10x8xbf16, #tpu.memory_space<vmem>>, %arg5: memref<72x80xbf16, #tpu.memory_space<vmem>>, %arg6: memref<1x80xf32, #tpu.memory_space<vmem>>, %arg7: memref<1x1x8x80xbf16, #tpu.memory_space<vmem>>) attributes {dimension_semantics = [#tpu.dimension_semantics<parallel>, #tpu.dimension_semantics<parallel>], iteration_bounds = array<i64: 2, 8>, scalar_prefetch = 0 : i64, scratch_operands = 0 : i64, tpu.core_type = #tpu.core_type<tc>, window_params = [{transform_indices = @transform_0, window_bounds = array<i64: 1, 1, 10, 8>}, {transform_indices = @transform_1, window_bounds = array<i64: 1, 1, 10, 8>}, {transform_indices = @transform_2, window_bounds = array<i64: 1, 1, 10, 8>}, {pipeline_mode = #tpu.pipeline_mode<synchronous>, transform_indices = @transform_3, window_bounds = array<i64: 72, 80>}, {pipeline_mode = #tpu.pipeline_mode<synchronous>, transform_indices = @transform_4, window_bounds = array<i64: 1, 80>}, {transform_indices = @transform_5, window_bounds = array<i64: 1, 1, 8, 80>}]} {
    %cst = arith.constant 0.000000e+00 : f32
    %0 = vector.broadcast %cst : f32 to vector<8x80xf32>
    %c0 = arith.constant 0 : index
    %c0_0 = arith.constant 0 : index
    %c0_1 = arith.constant 0 : index
    %c0_2 = arith.constant 0 : index
    %1 = vector.load %arg2[%c0, %c0_0, %c0_1, %c0_2] : memref<1x1x10x8xbf16, #tpu.memory_space<vmem>>, vector<1x1x10x8xbf16>
    %2 = vector.shape_cast %1 : vector<1x1x10x8xbf16> to vector<10x8xbf16>
    %3 = vector.extract_strided_slice %2 {offsets = [0, 0], sizes = [8, 8], strides = [1, 1]} : vector<10x8xbf16> to vector<8x8xbf16>
    %c0_3 = arith.constant 0 : index
    %c0_4 = arith.constant 0 : index
    %4 = vector.load %arg5[%c0_3, %c0_4] : memref<72x80xbf16, #tpu.memory_space<vmem>>, vector<8x80xbf16>
    %cst_5 = arith.constant dense<0.000000e+00> : vector<8x80xf32>
    %5 = tpu.matmul %3, %4, %cst_5 {dimension_numbers = #tpu.dot_dimension_numbers<[1], [0], [0], [1], [0, 0, 1, 1], [], []>} : vector<8x8xbf16>, vector<8x80xbf16>, vector<8x80xf32> -> vector<8x80xf32>
    %6 = arith.addf %0, %5 : vector<8x80xf32>
    %7 = vector.extract_strided_slice %2 {offsets = [1, 0], sizes = [8, 8], strides = [1, 1]} : vector<10x8xbf16> to vector<8x8xbf16>
    %c8 = arith.constant 8 : index
    %c0_6 = arith.constant 0 : index
    %8 = vector.load %arg5[%c8, %c0_6] : memref<72x80xbf16, #tpu.memory_space<vmem>>, vector<8x80xbf16>
    %cst_7 = arith.constant dense<0.000000e+00> : vector<8x80xf32>
    %9 = tpu.matmul %7, %8, %cst_7 {dimension_numbers = #tpu.dot_dimension_numbers<[1], [0], [0], [1], [0, 0, 1, 1], [], []>} : vector<8x8xbf16>, vector<8x80xbf16>, vector<8x80xf32> -> vector<8x80xf32>
    %10 = arith.addf %6, %9 : vector<8x80xf32>
    %11 = vector.extract_strided_slice %2 {offsets = [2, 0], sizes = [8, 8], strides = [1, 1]} : vector<10x8xbf16> to vector<8x8xbf16>
    %c16 = arith.constant 16 : index
    %c0_8 = arith.constant 0 : index
    %12 = vector.load %arg5[%c16, %c0_8] : memref<72x80xbf16, #tpu.memory_space<vmem>>, vector<8x80xbf16>
    %cst_9 = arith.constant dense<0.000000e+00> : vector<8x80xf32>
    %13 = tpu.matmul %11, %12, %cst_9 {dimension_numbers = #tpu.dot_dimension_numbers<[1], [0], [0], [1], [0, 0, 1, 1], [], []>} : vector<8x8xbf16>, vector<8x80xbf16>, vector<8x80xf32> -> vector<8x80xf32>
    %14 = arith.addf %10, %13 : vector<8x80xf32>
    %c0_10 = arith.constant 0 : index
    %c0_11 = arith.constant 0 : index
    %c0_12 = arith.constant 0 : index
    %c0_13 = arith.constant 0 : index
    %15 = vector.load %arg3[%c0_10, %c0_11, %c0_12, %c0_13] : memref<1x1x10x8xbf16, #tpu.memory_space<vmem>>, vector<1x1x10x8xbf16>
    %16 = vector.shape_cast %15 : vector<1x1x10x8xbf16> to vector<10x8xbf16>
    %17 = vector.extract_strided_slice %16 {offsets = [0, 0], sizes = [8, 8], strides = [1, 1]} : vector<10x8xbf16> to vector<8x8xbf16>
    %c24 = arith.constant 24 : index
    %c0_14 = arith.constant 0 : index
    %18 = vector.load %arg5[%c24, %c0_14] : memref<72x80xbf16, #tpu.memory_space<vmem>>, vector<8x80xbf16>
    %cst_15 = arith.constant dense<0.000000e+00> : vector<8x80xf32>
    %19 = tpu.matmul %17, %18, %cst_15 {dimension_numbers = #tpu.dot_dimension_numbers<[1], [0], [0], [1], [0, 0, 1, 1], [], []>} : vector<8x8xbf16>, vector<8x80xbf16>, vector<8x80xf32> -> vector<8x80xf32>
    %20 = arith.addf %14, %19 : vector<8x80xf32>
    %21 = vector.extract_strided_slice %16 {offsets = [1, 0], sizes = [8, 8], strides = [1, 1]} : vector<10x8xbf16> to vector<8x8xbf16>
    %c32 = arith.constant 32 : index
    %c0_16 = arith.constant 0 : index
    %22 = vector.load %arg5[%c32, %c0_16] : memref<72x80xbf16, #tpu.memory_space<vmem>>, vector<8x80xbf16>
    %cst_17 = arith.constant dense<0.000000e+00> : vector<8x80xf32>
    %23 = tpu.matmul %21, %22, %cst_17 {dimension_numbers = #tpu.dot_dimension_numbers<[1], [0], [0], [1], [0, 0, 1, 1], [], []>} : vector<8x8xbf16>, vector<8x80xbf16>, vector<8x80xf32> -> vector<8x80xf32>
    %24 = arith.addf %20, %23 : vector<8x80xf32>
    %25 = vector.extract_strided_slice %16 {offsets = [2, 0], sizes = [8, 8], strides = [1, 1]} : vector<10x8xbf16> to vector<8x8xbf16>
    %c40 = arith.constant 40 : index
    %c0_18 = arith.constant 0 : index
    %26 = vector.load %arg5[%c40, %c0_18] : memref<72x80xbf16, #tpu.memory_space<vmem>>, vector<8x80xbf16>
    %cst_19 = arith.constant dense<0.000000e+00> : vector<8x80xf32>
    %27 = tpu.matmul %25, %26, %cst_19 {dimension_numbers = #tpu.dot_dimension_numbers<[1], [0], [0], [1], [0, 0, 1, 1], [], []>} : vector<8x8xbf16>, vector<8x80xbf16>, vector<8x80xf32> -> vector<8x80xf32>
    %28 = arith.addf %24, %27 : vector<8x80xf32>
    %c0_20 = arith.constant 0 : index
    %c0_21 = arith.constant 0 : index
    %c0_22 = arith.constant 0 : index
    %c0_23 = arith.constant 0 : index
    %29 = vector.load %arg4[%c0_20, %c0_21, %c0_22, %c0_23] : memref<1x1x10x8xbf16, #tpu.memory_space<vmem>>, vector<1x1x10x8xbf16>
    %30 = vector.shape_cast %29 : vector<1x1x10x8xbf16> to vector<10x8xbf16>
    %31 = vector.extract_strided_slice %30 {offsets = [0, 0], sizes = [8, 8], strides = [1, 1]} : vector<10x8xbf16> to vector<8x8xbf16>
    %c48 = arith.constant 48 : index
    %c0_24 = arith.constant 0 : index
    %32 = vector.load %arg5[%c48, %c0_24] : memref<72x80xbf16, #tpu.memory_space<vmem>>, vector<8x80xbf16>
    %cst_25 = arith.constant dense<0.000000e+00> : vector<8x80xf32>
    %33 = tpu.matmul %31, %32, %cst_25 {dimension_numbers = #tpu.dot_dimension_numbers<[1], [0], [0], [1], [0, 0, 1, 1], [], []>} : vector<8x8xbf16>, vector<8x80xbf16>, vector<8x80xf32> -> vector<8x80xf32>
    %34 = arith.addf %28, %33 : vector<8x80xf32>
    %35 = vector.extract_strided_slice %30 {offsets = [1, 0], sizes = [8, 8], strides = [1, 1]} : vector<10x8xbf16> to vector<8x8xbf16>
    %c56 = arith.constant 56 : index
    %c0_26 = arith.constant 0 : index
    %36 = vector.load %arg5[%c56, %c0_26] : memref<72x80xbf16, #tpu.memory_space<vmem>>, vector<8x80xbf16>
    %cst_27 = arith.constant dense<0.000000e+00> : vector<8x80xf32>
    %37 = tpu.matmul %35, %36, %cst_27 {dimension_numbers = #tpu.dot_dimension_numbers<[1], [0], [0], [1], [0, 0, 1, 1], [], []>} : vector<8x8xbf16>, vector<8x80xbf16>, vector<8x80xf32> -> vector<8x80xf32>
    %38 = arith.addf %34, %37 : vector<8x80xf32>
    %39 = vector.extract_strided_slice %30 {offsets = [2, 0], sizes = [8, 8], strides = [1, 1]} : vector<10x8xbf16> to vector<8x8xbf16>
    %c64 = arith.constant 64 : index
    %c0_28 = arith.constant 0 : index
    %40 = vector.load %arg5[%c64, %c0_28] : memref<72x80xbf16, #tpu.memory_space<vmem>>, vector<8x80xbf16>
    %cst_29 = arith.constant dense<0.000000e+00> : vector<8x80xf32>
    %41 = tpu.matmul %39, %40, %cst_29 {dimension_numbers = #tpu.dot_dimension_numbers<[1], [0], [0], [1], [0, 0, 1, 1], [], []>} : vector<8x8xbf16>, vector<8x80xbf16>, vector<8x80xf32> -> vector<8x80xf32>
    %42 = arith.addf %38, %41 : vector<8x80xf32>
    %c0_30 = arith.constant 0 : index
    %c0_31 = arith.constant 0 : index
    %43 = vector.load %arg6[%c0_30, %c0_31] : memref<1x80xf32, #tpu.memory_space<vmem>>, vector<1x80xf32>
    %44 = vector.broadcast %43 : vector<1x80xf32> to vector<8x80xf32>
    %45 = arith.addf %42, %44 : vector<8x80xf32>
    %46 = arith.negf %45 : vector<8x80xf32>
    %47 = math.exp %46 : vector<8x80xf32>
    %cst_32 = arith.constant 1.000000e+00 : f32
    %48 = vector.broadcast %cst_32 : f32 to vector<8x80xf32>
    %49 = arith.addf %48, %47 : vector<8x80xf32>
    %50 = arith.divf %48, %49 : vector<8x80xf32>
    %51 = arith.mulf %45, %50 : vector<8x80xf32>
    %52 = arith.truncf %51 : vector<8x80xf32> to vector<8x80xbf16>
    %c0_33 = arith.constant 0 : index
    %c0_34 = arith.constant 0 : index
    %c0_35 = arith.constant 0 : index
    %c0_36 = arith.constant 0 : index
    %53 = vector.load %arg7[%c0_33, %c0_34, %c0_35, %c0_36] : memref<1x1x8x80xbf16, #tpu.memory_space<vmem>>, vector<1x1x8x80xbf16>
    %54 = vector.shape_cast %53 : vector<1x1x8x80xbf16> to vector<8x80xbf16>
    %55 = vector.shape_cast %52 : vector<8x80xbf16> to vector<1x1x8x80xbf16>
    tpu.vector_store %arg7[%c0_33, %c0_34, %c0_35, %c0_36], %55 {strides = array<i32>} : memref<1x1x8x80xbf16, #tpu.memory_space<vmem>>, vector<1x1x8x80xbf16>,
    return
  }
  func.func @transform_0(%arg0: i32, %arg1: i32) -> (i32, i32, i32, i32) {
    %c0_i32 = arith.constant 0 : i32
    %0 = arith.addi %arg1, %c0_i32 : i32
    %c0_i32_0 = arith.constant 0 : i32
    %c0_i32_1 = arith.constant 0 : i32
    %c0_i32_2 = arith.constant 0 : i32
    return %arg0, %0, %c0_i32_0, %c0_i32_1 : i32, i32, i32, i32
  }
  func.func @transform_1(%arg0: i32, %arg1: i32) -> (i32, i32, i32, i32) {
    %c1_i32 = arith.constant 1 : i32
    %0 = arith.addi %arg1, %c1_i32 : i32
    %c0_i32 = arith.constant 0 : i32
    %c0_i32_0 = arith.constant 0 : i32
    %c0_i32_1 = arith.constant 0 : i32
    return %arg0, %0, %c0_i32, %c0_i32_0 : i32, i32, i32, i32
  }
  func.func @transform_2(%arg0: i32, %arg1: i32) -> (i32, i32, i32, i32) {
    %c2_i32 = arith.constant 2 : i32
    %0 = arith.addi %arg1, %c2_i32 : i32
    %c0_i32 = arith.constant 0 : i32
    %c0_i32_0 = arith.constant 0 : i32
    %c0_i32_1 = arith.constant 0 : i32
    return %arg0, %0, %c0_i32, %c0_i32_0 : i32, i32, i32, i32
  }
  func.func @transform_3(%arg0: i32, %arg1: i32) -> (i32, i32) {
    %c0_i32 = arith.constant 0 : i32
    %c0_i32_0 = arith.constant 0 : i32
    %c0_i32_1 = arith.constant 0 : i32
    return %c0_i32, %c0_i32_0 : i32, i32
  }
  func.func @transform_4(%arg0: i32, %arg1: i32) -> (i32, i32) {
    %c0_i32 = arith.constant 0 : i32
    %c0_i32_0 = arith.constant 0 : i32
    %c0_i32_1 = arith.constant 0 : i32
    return %c0_i32, %c0_i32_0 : i32, i32
  }
  func.func @transform_5(%arg0: i32, %arg1: i32) -> (i32, i32, i32, i32) {
    %c0_i32 = arith.constant 0 : i32
    %c0_i32_0 = arith.constant 0 : i32
    %c0_i32_1 = arith.constant 0 : i32
    return %arg0, %arg1, %c0_i32, %c0_i32_0 : i32, i32, i32, i32
  }
}

</mosaic_0001>

<llo_original>
// kernel: tpu_custom_call.1
$region0: #{tpu_custom_call.1}
  #allocation0 [shape = 'u32[]', space=smem, size = 0x4, offset = 0x4, fixed_abs, tag = 'smem constant byte address 0x4 - core index']
  #allocation1 [shape = 'u32[72,128]{1,0:T(1,128)}', space=vmem, size = 0x9000, scoped, tag = 'internal scratch']
  %s0 = inlined_call_operand.vmem [shape: bf16[2,10,10,8], index: 0, kind: input, shape index: {}]
  %s1 = inlined_call_operand.vmem [shape: bf16[2,10,10,8], index: 1, kind: input, shape index: {}]
  %s2 = inlined_call_operand.vmem [shape: bf16[2,10,10,8], index: 2, kind: input, shape index: {}]
  %s3 = inlined_call_operand.vmem [shape: bf16[72,80], index: 3, kind: input, shape index: {}]
  %s4 = inlined_call_operand.vmem [shape: f32[1,80], index: 4, kind: input, shape index: {}]
  %s5 = inlined_call_operand.hbm [shape: bf16[2,8,8,80], index: 5, kind: output, shape index: {}]
  %s6 = sld [smem:[#allocation0]]
  $region53: #{tpu_custom_call.1} parent=0
    _
  %s8 = ssub.s32 1, %s6
  %s9 = scalar_select 0, %s8, %s6
  $region1: #{tpu_custom_call.1} parent=0
    #allocation2 [shape = 'u8[4096]{0}', space=vmem, size = 0x1000, scoped, tag = 'output window, operand 0']
    #allocation3 [shape = 's32[2]{0}', space=sflag, size = 0x8, scoped, tag = 'scoped memory for tpu_custom_call.1']
    %10 = vsyncpa [#allocation3], 0
    %s11 = scalar_lea.sflag [#allocation3], 1
    %12 = vsyncpa %s11, 0
    loop: start=0, step=1, limit=18
    $region2: #{tpu_custom_call.1} parent=1 // loop_pre_header
      _
    $region3: #{tpu_custom_call.1} parent=1 // loop_header
      %s14 = sphi 0, %s18
      %p15 = scmp.ge.s32.totalorder %s14, 18
      %s21 = sphi 0, %s33
      %s22 = sphi 0, %s29
      %s23 = sphi 0, %s21
      %s24 = sphi 0, %s22
      %s25 = sphi 0, %s23
      %s26 = sphi 0, %s24
      %s38 = sphi 0, %s40
      %s41 = sphi 0, %s38
      %s42 = sphi 0, %s41
      %s58 = sphi 0, %s42
      %s68 = sphi 0, %s70
      %s71 = sphi 0, %s68
      %s72 = sphi 0, %s71
      %s88 = sphi 0, %s72
      %s98 = sphi 0, %s100
      %s101 = sphi 0, %s98
      %s102 = sphi 0, %s101
      %s118 = sphi 0, %s102
      %s122 = sphi 0, %s122
      %s124 = sphi 0, %s122
      %s125 = sphi 0, %s124
      %s139 = sphi 0, %s125
      %s143 = sphi 0, %s143
      %s145 = sphi 0, %s143
      %s146 = sphi 0, %s145
      %s160 = sphi 0, %s146
      %s168 = sphi 0, %s170
      %s171 = sphi 0, %s168
      %s172 = sphi 0, %s171
      %s188 = sphi 0, %s172
    $region4: #{tpu_custom_call.1} parent=1 // loop_header_branch
      %17 = sbr.rel (%p15) target = $region8
    $region5: #{tpu_custom_call.1} parent=1 // loop_body
      %s19 = ssub.s32 %s14, 1
      %s20 = ssub.s32 %s14, 2
      %s27 = sadd.s32 1, %s22
      %p28 = scmp.ge.s32.totalorder %s27, 8
      %s29 = scalar_select %p28, 0, %s27
      %s30 = sadd.s32 1, %s21
      %s31 = scalar_select %p28, %s30, %s21
      %p32 = scmp.ge.s32.totalorder %s31, 2
      %s33 = scalar_select %p32, 0, %s31
      %s34 = ssub.s32 %s21, %s33
      %s35 = ssub.s32 %s22, %s29
      %s36 = sor.u32 %s34, %s35
      %p37 = scmp.eq.s32.totalorder %s36, 0
      %s39 = sadd.s32 %s38, 1
      %s40 = scalar_select %p37, %s38, %s39
      %p43 = pneg %p37
      %p44 = scmp.eq.s32.totalorder %s14, 15
      %p45 = por %p43, %p44
      %p46 = scmp.ne.s32.totalorder %s38, %s41
      %p47 = scmp.eq.s32.totalorder %s14, 0
      %p48 = por %p46, %p47
      %p49 = scmp.ne.s32.totalorder %s38, %s41
      %p50 = scmp.eq.s32.totalorder %s19, 15
      %p51 = por %p49, %p50
      %p52 = scmp.ne.s32.totalorder %s41, %s42
      %p53 = scmp.eq.s32.totalorder %s19, 0
      %p54 = por %p52, %p53
      %p55 = scmp.ne.s32.totalorder %s41, %s42
      %p56 = scmp.eq.s32.totalorder %s20, 15
      %p57 = por %p55, %p56
      %p59 = scmp.ne.s32.totalorder %s42, %s58
      %p60 = scmp.eq.s32.totalorder %s20, 0
      %p61 = por %p59, %p60
      %s62 = sadd.s32 %s22, 1
      %s63 = sadd.s32 %s29, 1
      %s64 = ssub.s32 %s21, %s33
      %s65 = ssub.s32 %s62, %s63
      %s66 = sor.u32 %s64, %s65
      %p67 = scmp.eq.s32.totalorder %s66, 0
      %s69 = sadd.s32 %s68, 1
      %s70 = scalar_select %p67, %s68, %s69
      %p73 = pneg %p67
      %p74 = scmp.eq.s32.totalorder %s14, 15
      %p75 = por %p73, %p74
      %p76 = scmp.ne.s32.totalorder %s68, %s71
      %p77 = scmp.eq.s32.totalorder %s14, 0
      %p78 = por %p76, %p77
      %p79 = scmp.ne.s32.totalorder %s68, %s71
      %p80 = scmp.eq.s32.totalorder %s19, 15
      %p81 = por %p79, %p80
      %p82 = scmp.ne.s32.totalorder %s71, %s72
      %p83 = scmp.eq.s32.totalorder %s19, 0
      %p84 = por %p82, %p83
      %p85 = scmp.ne.s32.totalorder %s71, %s72
      %p86 = scmp.eq.s32.totalorder %s20, 15
      %p87 = por %p85, %p86
      %p89 = scmp.ne.s32.totalorder %s72, %s88
      %p90 = scmp.eq.s32.totalorder %s20, 0
      %p91 = por %p89, %p90
      %s92 = sadd.s32 %s22, 2
      %s93 = sadd.s32 %s29, 2
      %s94 = ssub.s32 %s21, %s33
      %s95 = ssub.s32 %s92, %s93
      %s96 = sor.u32 %s94, %s95
      %p97 = scmp.eq.s32.totalorder %s96, 0
      %s99 = sadd.s32 %s98, 1
      %s100 = scalar_select %p97, %s98, %s99
      %p103 = pneg %p97
      %p104 = scmp.eq.s32.totalorder %s14, 15
      %p105 = por %p103, %p104
      %p106 = scmp.ne.s32.totalorder %s98, %s101
      %p107 = scmp.eq.s32.totalorder %s14, 0
      %p108 = por %p106, %p107
      %p109 = scmp.ne.s32.totalorder %s98, %s101
      %p110 = scmp.eq.s32.totalorder %s19, 15
      %p111 = por %p109, %p110
      %p112 = scmp.ne.s32.totalorder %s101, %s102
      %p113 = scmp.eq.s32.totalorder %s19, 0
      %p114 = por %p112, %p113
      %p115 = scmp.ne.s32.totalorder %s101, %s102
      %p116 = scmp.eq.s32.totalorder %s20, 15
      %p117 = por %p115, %p116
      %p119 = scmp.ne.s32.totalorder %s102, %s118
      %p120 = scmp.eq.s32.totalorder %s20, 0
      %p121 = por %p119, %p120
      %s123 = sadd.s32 %s122, 1
      %p126 = scmp.eq.s32.totalorder %s14, 15
      %p127 = scmp.ne.s32.totalorder %s122, %s124
      %p128 = scmp.eq.s32.totalorder %s14, 0
      %p129 = por %p127, %p128
      %p130 = scmp.ne.s32.totalorder %s122, %s124
      %p131 = scmp.eq.s32.totalorder %s19, 15
      %p132 = por %p130, %p131
      %p133 = scmp.ne.s32.totalorder %s124, %s125
      %p134 = scmp.eq.s32.totalorder %s19, 0
      %p135 = por %p133, %p134
      %p136 = scmp.ne.s32.totalorder %s124, %s125
      %p137 = scmp.eq.s32.totalorder %s20, 15
      %p138 = por %p136, %p137
      %p140 = scmp.ne.s32.totalorder %s125, %s139
      %p141 = scmp.eq.s32.totalorder %s20, 0
      %p142 = por %p140, %p141
      %s144 = sadd.s32 %s143, 1
      %p147 = scmp.eq.s32.totalorder %s14, 15
      %p148 = scmp.ne.s32.totalorder %s143, %s145
      %p149 = scmp.eq.s32.totalorder %s14, 0
      %p150 = por %p148, %p149
      %p151 = scmp.ne.s32.totalorder %s143, %s145
      %p152 = scmp.eq.s32.totalorder %s19, 15
      %p153 = por %p151, %p152
      %p154 = scmp.ne.s32.totalorder %s145, %s146
      %p155 = scmp.eq.s32.totalorder %s19, 0
      %p156 = por %p154, %p155
      %p157 = scmp.ne.s32.totalorder %s145, %s146
      %p158 = scmp.eq.s32.totalorder %s20, 15
      %p159 = por %p157, %p158
      %p161 = scmp.ne.s32.totalorder %s146, %s160
      %p162 = scmp.eq.s32.totalorder %s20, 0
      %p163 = por %p161, %p162
      %s164 = ssub.s32 %s21, %s33
      %s165 = ssub.s32 %s22, %s29
      %s166 = sor.u32 %s164, %s165
      %p167 = scmp.eq.s32.totalorder %s166, 0
      %s169 = sadd.s32 %s168, 1
      %s170 = scalar_select %p167, %s168, %s169
      %p173 = pneg %p167
      %p174 = scmp.eq.s32.totalorder %s14, 15
      %p175 = por %p173, %p174
      %p176 = scmp.ne.s32.totalorder %s168, %s171
      %p177 = scmp.eq.s32.totalorder %s14, 0
      %p178 = por %p176, %p177
      %p179 = scmp.ne.s32.totalorder %s168, %s171
      %p180 = scmp.eq.s32.totalorder %s19, 15
      %p181 = por %p179, %p180
      %p182 = scmp.ne.s32.totalorder %s171, %s172
      %p183 = scmp.eq.s32.totalorder %s19, 0
      %p184 = por %p182, %p183
      %p185 = scmp.ne.s32.totalorder %s171, %s172
      %p186 = scmp.eq.s32.totalorder %s20, 15
      %p187 = por %p185, %p186
      %p189 = scmp.ne.s32.totalorder %s172, %s188
      %p190 = scmp.eq.s32.totalorder %s20, 0
      %p191 = por %p189, %p190
      %p192 = scmp.le.s32.totalorder 1, %s14
      %p193 = scmp.lt.s32.totalorder %s14, 17
      %p194 = pnand %p192, %p193
      %p195 = pneg %p194
      // Predicated region
      $region9: #{tpu_custom_call.1} parent=5 // pred_check
        _
      $region10: #{tpu_custom_call.1} parent=5 // pred_check_branch
        %197 = sbr.rel (%p194) target = $region12
      $region11: #{tpu_custom_call.1} parent=5 // pred_region
        %s198 = ssub.s32 %s14, 1
        // Predicated region
        $region13: #{tpu_custom_call.1} parent=11 // pred_check
          %p199 = pneg %p135
        $region14: #{tpu_custom_call.1} parent=11 // pred_check_branch
          %201 = sbr.rel (%p199) target = $region16
        $region15: #{tpu_custom_call.1} parent=11 // pred_region
          _
        $region16: #{tpu_custom_call.1} parent=11 // pred_fallthru
          _
        // Predicated region
        $region17: #{tpu_custom_call.1} parent=11 // pred_check
          %p202 = pneg %p156
        $region18: #{tpu_custom_call.1} parent=11 // pred_check_branch
          %204 = sbr.rel (%p202) target = $region20
        $region19: #{tpu_custom_call.1} parent=11 // pred_region
          _
        $region20: #{tpu_custom_call.1} parent=11 // pred_fallthru
          _
      $region12: #{tpu_custom_call.1} parent=5 // pred_fallthru
        _
      %p205 = scmp.lt.s32.totalorder %s14, 16
      // Predicated region
      $region21: #{tpu_custom_call.1} parent=5 // pred_check
        %p206 = pneg %p205
      $region22: #{tpu_custom_call.1} parent=5 // pred_check_branch
        %208 = sbr.rel (%p206) target = $region24
      $region23: #{tpu_custom_call.1} parent=5 // pred_region
        // Predicated region
        $region25: #{tpu_custom_call.1} parent=23 // pred_check
          %p209 = pneg %p48
        $region26: #{tpu_custom_call.1} parent=23 // pred_check_branch
          %211 = sbr.rel (%p209) target = $region28
        $region27: #{tpu_custom_call.1} parent=23 // pred_region
          %p212 = scmp.lt.s32.totalorder %s21, 1
          %s213 = scalar_select %p212, %s21, 1
          %p214 = scmp.lt.s32.totalorder %s22, 9
          %s215 = scalar_select %p214, %s22, 9
          %s216 = smul.addr %s215, 2
          %s217 = smul.addr %s213, 20
          %s218 = sadd.s32 %s216, %s217
          %s219 = smul.addr %s218, 4
          %s220 = scalar_lea.vmem %s0, %s219
        $region28: #{tpu_custom_call.1} parent=23 // pred_fallthru
          _
        // Predicated region
        $region29: #{tpu_custom_call.1} parent=23 // pred_check
          %p221 = pneg %p78
        $region30: #{tpu_custom_call.1} parent=23 // pred_check_branch
          %223 = sbr.rel (%p221) target = $region32
        $region31: #{tpu_custom_call.1} parent=23 // pred_region
          %s224 = sadd.s32 %s22, 1
          %p225 = scmp.lt.s32.totalorder %s21, 1
          %s226 = scalar_select %p225, %s21, 1
          %p227 = scmp.lt.s32.totalorder %s224, 9
          %s228 = scalar_select %p227, %s224, 9
          %s229 = smul.addr %s228, 2
          %s230 = smul.addr %s226, 20
          %s231 = sadd.s32 %s229, %s230
          %s232 = smul.addr %s231, 4
          %s233 = scalar_lea.vmem %s1, %s232
          %s234 = sadd.s32 %s22, 1
        $region32: #{tpu_custom_call.1} parent=23 // pred_fallthru
          _
        // Predicated region
        $region33: #{tpu_custom_call.1} parent=23 // pred_check
          %p235 = pneg %p108
        $region34: #{tpu_custom_call.1} parent=23 // pred_check_branch
          %237 = sbr.rel (%p235) target = $region36
        $region35: #{tpu_custom_call.1} parent=23 // pred_region
          %s238 = sadd.s32 %s22, 2
          %p239 = scmp.lt.s32.totalorder %s21, 1
          %s240 = scalar_select %p239, %s21, 1
          %p241 = scmp.lt.s32.totalorder %s238, 9
          %s242 = scalar_select %p241, %s238, 9
          %s243 = smul.addr %s242, 2
          %s244 = smul.addr %s240, 20
          %s245 = sadd.s32 %s243, %s244
          %s246 = smul.addr %s245, 4
          %s247 = scalar_lea.vmem %s2, %s246
          %s248 = sadd.s32 %s22, 2
        $region36: #{tpu_custom_call.1} parent=23 // pred_fallthru
          _
      $region24: #{tpu_custom_call.1} parent=5 // pred_fallthru
        _
      %p249 = scmp.le.s32.totalorder 1, %s14
      %p250 = scmp.lt.s32.totalorder %s14, 17
      %p251 = pnand %p249, %p250
      %p252 = pneg %p251
      // Predicated region
      $region37: #{tpu_custom_call.1} parent=5 // pred_check
        _
      $region38: #{tpu_custom_call.1} parent=5 // pred_check_branch
        %254 = sbr.rel (%p251) target = $region40
      $region39: #{tpu_custom_call.1} parent=5 // pred_region
        %s255 = ssub.s32 %s14, 1
        %p256 = scmp.lt.s32.totalorder %s23, 1
        %s257 = scalar_select %p256, %s23, 1
        %p258 = scmp.lt.s32.totalorder %s24, 9
        %s259 = scalar_select %p258, %s24, 9
        %s260 = smul.addr %s259, 2
        %s261 = smul.addr %s257, 20
        %s262 = sadd.s32 %s260, %s261
        %s263 = smul.addr %s262, 4
        %s264 = scalar_lea.vmem %s0, %s263
        %p265 = pneg %p54
        %p266 = pneg %p51
        %s267 = sadd.s32 %s24, 1
        %p268 = scmp.lt.s32.totalorder %s23, 1
        %s269 = scalar_select %p268, %s23, 1
        %p270 = scmp.lt.s32.totalorder %s267, 9
        %s271 = scalar_select %p270, %s267, 9
        %s272 = smul.addr %s271, 2
        %s273 = smul.addr %s269, 20
        %s274 = sadd.s32 %s272, %s273
        %s275 = smul.addr %s274, 4
        %s276 = scalar_lea.vmem %s1, %s275
        %p277 = pneg %p84
        %p278 = pneg %p81
        %s279 = sadd.s32 %s24, 2
        %p280 = scmp.lt.s32.totalorder %s23, 1
        %s281 = scalar_select %p280, %s23, 1
        %p282 = scmp.lt.s32.totalorder %s279, 9
        %s283 = scalar_select %p282, %s279, 9
        %s284 = smul.addr %s283, 2
        %s285 = smul.addr %s281, 20
        %s286 = sadd.s32 %s284, %s285
        %s287 = smul.addr %s286, 4
        %s288 = scalar_lea.vmem %s2, %s287
        %p289 = pneg %p114
        %p290 = pneg %p111
        %p291 = pneg %p135
        %p292 = pneg %p132
        %p293 = pneg %p156
        %p294 = pneg %p153
        %p295 = pneg %p184
        %p296 = pneg %p181
        %s297 = sand.u32 %s171, 1
        %s298 = scalar_lea.sflag [#allocation3], %s297
        %s299 = sand.u32 %s171, 1
        %s300 = smul.addr %s299, 4
        %s301 = scalar_lea.vmem [#allocation2], %s300
        %p302 = scmp.lt.s32.totalorder %s23, 1
        %s303 = scalar_select %p302, %s23, 1
        %p304 = scmp.lt.s32.totalorder %s24, 9
        %s305 = scalar_select %p304, %s24, 9
        %s306 = smul.addr %s305, 2
        %s307 = smul.addr %s303, 20
        %s308 = sadd.s32 %s306, %s307
        %s309 = smul.addr %s308, 4
        %s310 = scalar_lea.vmem %s0, %s309
        %s311 = sadd.s32 %s24, 1
        %p312 = scmp.lt.s32.totalorder %s23, 1
        %s313 = scalar_select %p312, %s23, 1
        %p314 = scmp.lt.s32.totalorder %s311, 9
        %s315 = scalar_select %p314, %s311, 9
        %s316 = smul.addr %s315, 2
        %s317 = smul.addr %s313, 20
        %s318 = sadd.s32 %s316, %s317
        %s319 = smul.addr %s318, 4
        %s320 = scalar_lea.vmem %s1, %s319
        %s321 = sadd.s32 %s24, 1
        %s322 = sadd.s32 %s24, 2
        %p323 = scmp.lt.s32.totalorder %s23, 1
        %s324 = scalar_select %p323, %s23, 1
        %p325 = scmp.lt.s32.totalorder %s322, 9
        %s326 = scalar_select %p325, %s322, 9
        %s327 = smul.addr %s326, 2
        %s328 = smul.addr %s324, 20
        %s329 = sadd.s32 %s327, %s328
        %s330 = smul.addr %s329, 4
        %s331 = scalar_lea.vmem %s2, %s330
        %s332 = sadd.s32 %s24, 2
        %v334 = vld [vmem:[%s310] sm:$0xf]
        %v335 = vld [vmem:[%s310 + $0x4] sm:$0x1]
        %v336 = vld [vmem:[%s3] sm:$0xf]
        %v337 = vld [vmem:[%s3 + $0x4] sm:$0xf]
        %v340 = vunpack.c.l.b16 %v334
        %v341 = vunpack.c.l.b16 %v335
        %v342 = vpack.c.b16 %v341, %v340
        %v344 = vshrl.u32 %v342, 16
        %v346 = vshll.u32 %v342, 16
        %v348 = vrot.slane %v346, 1
        %v349 = vor.u32 %v344, %v348
        %vm350 = vcmask 64512
        %v352 = vsel %vm350, %v349, 0
        %vm354 = vcmask 1043456
        %v356 = vsel %vm354, %v337, 0
        %358 = vmatpush.bf16.msra.mxu0 0
        %359 = vmatpush.bf16.msra.mxu0 0
        %360 = vmatpush.bf16.msra.mxu0 0
        %361 = vmatpush.bf16.msra.mxu0 0
        %362 = vmatpush.bf16.msra.mxu0 0
        %363 = vmatpush.bf16.msra.mxu0 0
        %364 = vmatpush.bf16.msra.mxu0 0
        %365 = vmatpush.bf16.msra.mxu0 %v356
        %366 = vmatmul.bf16.gmra.mxu0 %v352
        %v367 = vpop.f32.mrf.mxu0
        %v368 = vadd.f32 0.0, %v367
        %v369 = vpop.f32.mrf.mxu0
        %370 = vdwg.mxu0
        %v372 = vsel %vm350, %v334, 0
        %v375 = vsel %vm354, %v336, 0
        %377 = vmatpush.bf16.msra.mxu0 0
        %378 = vmatpush.bf16.msra.mxu0 0
        %379 = vmatpush.bf16.msra.mxu0 0
        %380 = vmatpush.bf16.msra.mxu0 0
        %381 = vmatpush.bf16.msra.mxu0 0
        %382 = vmatpush.bf16.msra.mxu0 0
        %383 = vmatpush.bf16.msra.mxu0 0
        %384 = vmatpush.bf16.msra.mxu0 %v375
        %385 = vmatmul.bf16.gmra.mxu0 %v372
        %v386 = vpop.f32.mrf.mxu0
        %v387 = vadd.f32 %v368, %v386
        %v388 = vpop.f32.mrf.mxu0
        %389 = vdwg.mxu0
        %v390 = vld [vmem:[%s3 + $0x8] sm:$0xf]
        %v391 = vrot.slane %v342, 1
        %v393 = vsel %vm350, %v391, 0
        %v396 = vsel %vm354, %v390, 0
        %398 = vmatpush.bf16.msra.mxu0 0
        %399 = vmatpush.bf16.msra.mxu0 0
        %400 = vmatpush.bf16.msra.mxu0 0
        %401 = vmatpush.bf16.msra.mxu0 0
        %402 = vmatpush.bf16.msra.mxu0 0
        %403 = vmatpush.bf16.msra.mxu0 0
        %404 = vmatpush.bf16.msra.mxu0 0
        %405 = vmatpush.bf16.msra.mxu0 %v396
        %406 = vmatmul.bf16.gmra.mxu0 %v393
        %v407 = vpop.f32.mrf.mxu0
        %v408 = vadd.f32 0.0, %v407
        %v409 = vpop.f32.mrf.mxu0
        %410 = vdwg.mxu0
        %v411 = vadd.f32 %v387, %v408
        %v412 = vld [vmem:[%s320] sm:$0xf]
        %v413 = vld [vmem:[%s320 + $0x4] sm:$0x1]
        %v414 = vld [vmem:[%s3 + $0xc] sm:$0xf]
        %v416 = vsel %vm350, %v412, 0
        %v419 = vsel %vm354, %v414, 0
        %421 = vmatpush.bf16.msra.mxu0 0
        %422 = vmatpush.bf16.msra.mxu0 0
        %423 = vmatpush.bf16.msra.mxu0 0
        %424 = vmatpush.bf16.msra.mxu0 0
        %425 = vmatpush.bf16.msra.mxu0 0
        %426 = vmatpush.bf16.msra.mxu0 0
        %427 = vmatpush.bf16.msra.mxu0 0
        %428 = vmatpush.bf16.msra.mxu0 %v419
        %429 = vmatmul.bf16.gmra.mxu0 %v416
        %v430 = vpop.f32.mrf.mxu0
        %v431 = vadd.f32 0.0, %v430
        %v432 = vpop.f32.mrf.mxu0
        %433 = vdwg.mxu0
        %v434 = vadd.f32 %v411, %v431
        %v435 = vld [vmem:[%s3 + $0x10] sm:$0xf]
        %v438 = vunpack.c.l.b16 %v412
        %v439 = vunpack.c.l.b16 %v413
        %v440 = vpack.c.b16 %v439, %v438
        %v442 = vshrl.u32 %v440, 16
        %v444 = vshll.u32 %v440, 16
        %v446 = vrot.slane %v444, 1
        %v447 = vor.u32 %v442, %v446
        %v449 = vsel %vm350, %v447, 0
        %v452 = vsel %vm354, %v435, 0
        %454 = vmatpush.bf16.msra.mxu0 0
        %455 = vmatpush.bf16.msra.mxu0 0
        %456 = vmatpush.bf16.msra.mxu0 0
        %457 = vmatpush.bf16.msra.mxu0 0
        %458 = vmatpush.bf16.msra.mxu0 0
        %459 = vmatpush.bf16.msra.mxu0 0
        %460 = vmatpush.bf16.msra.mxu0 0
        %461 = vmatpush.bf16.msra.mxu0 %v452
        %462 = vmatmul.bf16.gmra.mxu0 %v449
        %v463 = vpop.f32.mrf.mxu0
        %v464 = vadd.f32 0.0, %v463
        %v465 = vpop.f32.mrf.mxu0
        %466 = vdwg.mxu0
        %v467 = vadd.f32 %v434, %v464
        %v468 = vld [vmem:[%s3 + $0x14] sm:$0xf]
        %v469 = vrot.slane %v440, 1
        %v471 = vsel %vm350, %v469, 0
        %v474 = vsel %vm354, %v468, 0
        %476 = vmatpush.bf16.msra.mxu0 0
        %477 = vmatpush.bf16.msra.mxu0 0
        %478 = vmatpush.bf16.msra.mxu0 0
        %479 = vmatpush.bf16.msra.mxu0 0
        %480 = vmatpush.bf16.msra.mxu0 0
        %481 = vmatpush.bf16.msra.mxu0 0
        %482 = vmatpush.bf16.msra.mxu0 0
        %483 = vmatpush.bf16.msra.mxu0 %v474
        %484 = vmatmul.bf16.gmra.mxu0 %v471
        %v485 = vpop.f32.mrf.mxu0
        %v486 = vadd.f32 0.0, %v485
        %v487 = vpop.f32.mrf.mxu0
        %488 = vdwg.mxu0
        %v489 = vadd.f32 %v467, %v486
        %v490 = vld [vmem:[%s331] sm:$0xf]
        %v491 = vld [vmem:[%s331 + $0x4] sm:$0x1]
        %v492 = vld [vmem:[%s3 + $0x18] sm:$0xf]
        %v494 = vsel %vm350, %v490, 0
        %v497 = vsel %vm354, %v492, 0
        %499 = vmatpush.bf16.msra.mxu0 0
        %500 = vmatpush.bf16.msra.mxu0 0
        %501 = vmatpush.bf16.msra.mxu0 0
        %502 = vmatpush.bf16.msra.mxu0 0
        %503 = vmatpush.bf16.msra.mxu0 0
        %504 = vmatpush.bf16.msra.mxu0 0
        %505 = vmatpush.bf16.msra.mxu0 0
        %506 = vmatpush.bf16.msra.mxu0 %v497
        %507 = vmatmul.bf16.gmra.mxu0 %v494
        %v508 = vpop.f32.mrf.mxu0
        %v509 = vadd.f32 0.0, %v508
        %v510 = vpop.f32.mrf.mxu0
        %511 = vdwg.mxu0
        %v512 = vadd.f32 %v489, %v509
        %v513 = vld [vmem:[%s3 + $0x1c] sm:$0xf]
        %v516 = vunpack.c.l.b16 %v490
        %v517 = vunpack.c.l.b16 %v491
        %v518 = vpack.c.b16 %v517, %v516
        %v520 = vshrl.u32 %v518, 16
        %v522 = vshll.u32 %v518, 16
        %v524 = vrot.slane %v522, 1
        %v525 = vor.u32 %v520, %v524
        %v527 = vsel %vm350, %v525, 0
        %v530 = vsel %vm354, %v513, 0
        %532 = vmatpush.bf16.msra.mxu0 0
        %533 = vmatpush.bf16.msra.mxu0 0
        %534 = vmatpush.bf16.msra.mxu0 0
        %535 = vmatpush.bf16.msra.mxu0 0
        %536 = vmatpush.bf16.msra.mxu0 0
        %537 = vmatpush.bf16.msra.mxu0 0
        %538 = vmatpush.bf16.msra.mxu0 0
        %539 = vmatpush.bf16.msra.mxu0 %v530
        %540 = vmatmul.bf16.gmra.mxu0 %v527
        %v541 = vpop.f32.mrf.mxu0
        %v542 = vadd.f32 0.0, %v541
        %v543 = vpop.f32.mrf.mxu0
        %544 = vdwg.mxu0
        %v545 = vadd.f32 %v512, %v542
        %v546 = vld [vmem:[%s3 + $0x20] sm:$0xf]
        %v547 = vrot.slane %v518, 1
        %v549 = vsel %vm350, %v547, 0
        %v552 = vsel %vm354, %v546, 0
        %554 = vmatpush.bf16.msra.mxu0 0
        %555 = vmatpush.bf16.msra.mxu0 0
        %556 = vmatpush.bf16.msra.mxu0 0
        %557 = vmatpush.bf16.msra.mxu0 0
        %558 = vmatpush.bf16.msra.mxu0 0
        %559 = vmatpush.bf16.msra.mxu0 0
        %560 = vmatpush.bf16.msra.mxu0 0
        %561 = vmatpush.bf16.msra.mxu0 %v552
        %562 = vmatmul.bf16.gmra.mxu0 %v549
        %v563 = vpop.f32.mrf.mxu0
        %v564 = vadd.f32 0.0, %v563
        %v565 = vpop.f32.mrf.mxu0
        %566 = vdwg.mxu0
        %v567 = vadd.f32 %v545, %v564
        %v568 = vld [vmem:[%s4] sm:$0x1]
        %v570 = vperm.slane %v568, 0
        %v572 = vadd.f32 %v567, %v570
        %v573 = vxor.u32 %v572, 2147483648
        %v574 = vmul.f32 %v573, 1.442695
        %v575 = vpow.pop %v574
        %v576 = vadd.f32 %v575, 1.0
        %v577 = vrcp.pop %v576
        %v578 = vmul.f32 %v576, %v577
        %v579 = vsub.f32 1.0, %v578
        %v580 = vmul.f32 %v577, %v579
        %v581 = vadd.f32 %v577, %v580
        %vm582 = vweird.f32 %v576
        %vm583 = vweird.f32 %v577
        %vm584 = vmor %vm582, %vm583
        %v585 = vsel %vm584, %v577, %v581
        %v586 = vand.u32 2147483647, %v576
        %vm587 = vcmp.eq.f32.partialorder %v586, 8.507059e+37
        %v588 = vand.u32 %v576, 2147483648
        %v589 = vor.u32 1.1754944e-38, %v588
        %v590 = vsel %vm587, %v589, %v585
        %v591 = vmul.f32 1.0, %v590
        %v592 = vmul.f32 %v572, %v591
        %v593 = vpack.c.bf16 %v592, %v592
        %vm594 = vcmask 650240
        %595 = vst.msk [vmem:[%s301] sm:$0xf] %vm594, %v593
        %s596 = sand.u32 %s171, 1
        %s597 = scalar_lea.sflag [#allocation3], %s596
        %s598 = sand.u32 %s171, 1
        %s599 = smul.addr %s598, 4
        %s600 = scalar_lea.vmem [#allocation2], %s599
        // Predicated region
        $region41: #{tpu_custom_call.1} parent=39 // pred_check
          %p601 = pneg %p181
        $region42: #{tpu_custom_call.1} parent=39 // pred_check_branch
          %603 = sbr.rel (%p601) target = $region44
        $region43: #{tpu_custom_call.1} parent=39 // pred_region
          %605 = vsyncadd %s597, 0
          %s606 = smul.addr %s23, 8
          %s607 = sadd.s32 %s24, %s606
          %s608 = smul.addr %s607, 4
          %s609 = scalar_lea.hbm %s5, %s608
          %s611 = sshll.u32 %s600, 4
          %s612 = int_to_ptr.vmem [resolvable:$true] %s611
          %s613 = sshll.u32 %s609, 4
          %s614 = int_to_ptr.hbm [resolvable:$true] %s613
          %616 = dma.vmem_to_hbm [thread:$0]  %s612, 64, %s614, %s597
        $region44: #{tpu_custom_call.1} parent=39 // pred_fallthru
          _
      $region40: #{tpu_custom_call.1} parent=5 // pred_fallthru
        _
      %p617 = scmp.le.s32.totalorder 2, %s14
      // Predicated region
      $region45: #{tpu_custom_call.1} parent=5 // pred_check
        %p618 = pneg %p617
      $region46: #{tpu_custom_call.1} parent=5 // pred_check_branch
        %620 = sbr.rel (%p618) target = $region48
      $region47: #{tpu_custom_call.1} parent=5 // pred_region
        %s621 = ssub.s32 %s14, 2
        // Predicated region
        $region49: #{tpu_custom_call.1} parent=47 // pred_check
          %p622 = pneg %p187
        $region50: #{tpu_custom_call.1} parent=47 // pred_check_branch
          %624 = sbr.rel (%p622) target = $region52
        $region51: #{tpu_custom_call.1} parent=47 // pred_region
          %s625 = sand.u32 %s172, 1
          %s626 = scalar_lea.sflag [#allocation3], %s625
          %s627 = sand.u32 %s172, 1
          %s628 = smul.addr %s627, 4
          %s629 = scalar_lea.vmem [#allocation2], %s628
          %631 = dma.done %s626, 64
        $region52: #{tpu_custom_call.1} parent=47 // pred_fallthru
          _
      $region48: #{tpu_custom_call.1} parent=5 // pred_fallthru
        _
    $region6: #{tpu_custom_call.1} parent=1 // loop_footer
      %s18 = sadd.s32 1, %s14
    $region7: #{tpu_custom_call.1} parent=1 // loop_footer_branch
      %13 = sbr.rel target = $region3
    $region8: #{tpu_custom_call.1} parent=1 // loop_exit
      _
    %632 = vsyncpa [#allocation3], 1
    %s633 = scalar_lea.sflag [#allocation3], 1
    %634 = vsyncpa %s633, 1

</llo_original>
